<compile_context>
chip_gen: v6e
topology: v6e:2x2x1
jax: 0.10.0
libtpu: 0.0.40
codegen_flags: <defaults>
</compile_context>

<pallas_src>
import numpy as np
import jax
import jax.numpy as jnp
from jax.experimental import pallas as pl
from jax.experimental.pallas import tpu as pltpu

# Problem sizes (small, consistent with the module's forward contract).
B = 2              # batch
C_IN = 3           # images are [B, 3, H, W]
H = 16
W = 16
C_OUT = 8          # backbone feature channels
NUM_CLASSES = 10
K = 3              # conv kernel size, SAME padding

LANE = 128         # lane-dense width for all matmul operands / output
B_PAD = 8          # sublane-aligned batch rows for the output block
HW = H * W
BHW = B * HW
PATCH = K * K * C_IN          # 27
PATCH_AUG = PATCH + 1         # +1 ones column that carries the conv bias


def _cnnfe_kernel(patches_ref, wconv_ref, pool_ref, wfc_ref, bfc_ref, out_ref):
    """Single grid step over the whole (tiny) problem.

    patches_ref: (BHW, 128)   im2col patches, lane-padded, ones column at PATCH
    wconv_ref:   (128, 128)   conv weights (rows 0..26) + conv bias (row 27), zero-padded
    pool_ref:    (B_PAD, BHW) block-diagonal pooling matrix, already scaled by 1/(H*W)
    wfc_ref:     (128, 128)   FC weights, zero-padded
    bfc_ref:     (B_PAD, 128) FC bias, pre-broadcast, zero-padded
    out_ref:     (B_PAD, 128) logits (only [:B, :NUM_CLASSES] meaningful)
    """
    # Conv (+ bias) for every output pixel of every batch element: one MXU push.
    conv = jnp.dot(patches_ref[...], wconv_ref[...],
                   preferred_element_type=jnp.float32)
    act = jnp.maximum(conv, 0.0)                                   # ReLU (VPU)

    # Global average pool fused into a matmul (mean factor baked into pool_ref).
    pooled = jnp.dot(pool_ref[...], act, preferred_element_type=jnp.float32)

    # FC head.
    logits = jnp.dot(pooled, wfc_ref[...],
                     preferred_element_type=jnp.float32) + bfc_ref[...]
    out_ref[...] = logits.astype(out_ref.dtype)


def cnnfe_forward(images_nchw, w_conv, b_conv, w_fc, b_fc):
    """images_nchw: (B, C_IN, H, W) float32 -> logits (B, NUM_CLASSES)."""
    # --- layout plumbing in plain JAX (free relative to the kernel) ---
    x = jnp.transpose(images_nchw, (0, 2, 3, 1)).astype(jnp.float32)   # NHWC
    xp = jnp.pad(x, ((0, 0), (1, 1), (1, 1), (0, 0)))                  # SAME pad

    # im2col: (B*H*W, K*K*C_IN); tap order (dy, dx, cin) matches w_conv.reshape below.
    taps = [xp[:, dy:dy + H, dx:dx + W, :] for dy in range(K) for dx in range(K)]
    patches = jnp.stack(taps, axis=3).reshape(BHW, PATCH)
    patches = jnp.concatenate(
        [patches, jnp.ones((BHW, 1), jnp.float32)], axis=1)            # bias column
    patches = jnp.pad(patches, ((0, 0), (0, LANE - PATCH_AUG)))        # (BHW, 128)

    # Conv weights + bias folded into a single lane-dense matrix.
    w_mat = w_conv.reshape(PATCH, C_OUT)
    w_mat = jnp.concatenate([w_mat, b_conv.reshape(1, C_OUT)], axis=0)  # (28, C_OUT)
    w_mat = jnp.pad(w_mat, ((0, LANE - PATCH_AUG), (0, LANE - C_OUT)))  # (128, 128)

    # Pooling matrix: block-diagonal ones scaled by 1/(H*W); zero rows pad batch to 8.
    pool = jnp.kron(jnp.eye(B, dtype=jnp.float32),
                    jnp.ones((1, HW), jnp.float32)) / float(HW)
    pool = jnp.pad(pool, ((0, B_PAD - B), (0, 0)))                      # (8, BHW)

    # FC weights / bias, zero-padded lane-dense; bias pre-broadcast to the output block.
    w_fc_pad = jnp.pad(w_fc, ((0, LANE - C_OUT), (0, LANE - NUM_CLASSES)))
    b_fc_pad = jnp.pad(b_fc, (0, LANE - NUM_CLASSES))
    b_fc_pad = jnp.broadcast_to(b_fc_pad[None, :], (B_PAD, LANE))

    flops = 2 * (BHW * LANE * LANE + B_PAD * BHW * LANE + B_PAD * LANE * LANE)
    bytes_accessed = 4 * (BHW * LANE + LANE * LANE + B_PAD * BHW
                          + LANE * LANE + B_PAD * LANE + B_PAD * LANE)

    out = pl.pallas_call(
        _cnnfe_kernel,
        out_shape=jax.ShapeDtypeStruct((B_PAD, LANE), jnp.float32),
        grid_spec=pltpu.PrefetchScalarGridSpec(
            num_scalar_prefetch=0,
            grid=(1,),
            in_specs=[
                pl.BlockSpec((BHW, LANE), lambda i: (0, 0)),
                pl.BlockSpec((LANE, LANE), lambda i: (0, 0)),
                pl.BlockSpec((B_PAD, BHW), lambda i: (0, 0)),
                pl.BlockSpec((LANE, LANE), lambda i: (0, 0)),
                pl.BlockSpec((B_PAD, LANE), lambda i: (0, 0)),
            ],
            out_specs=pl.BlockSpec((B_PAD, LANE), lambda i: (0, 0)),
        ),
        compiler_params=pltpu.CompilerParams(
            dimension_semantics=("arbitrary",)),
        cost_estimate=pl.CostEstimate(
            flops=flops, transcendentals=0, bytes_accessed=bytes_accessed),
    )(patches, w_mat, pool, w_fc_pad, b_fc_pad)

    # Slice the lane-dense output block back to the logical shape.
    return out[:B, :NUM_CLASSES]


def _reference_forward(images_nchw, w_conv, b_conv, w_fc, b_fc):
    """Pure-JAX reference (same math, NHWC conv)."""
    x = jnp.transpose(images_nchw, (0, 2, 3, 1))
    y = jax.lax.conv_general_dilated(
        x, w_conv, window_strides=(1, 1), padding="SAME",
        dimension_numbers=("NHWC", "HWIO", "NHWC"))
    y = jnp.maximum(y + b_conv[None, None, None, :], 0.0)
    pooled = jnp.mean(y, axis=(1, 2))
    return pooled @ w_fc + b_fc[None, :]


if __name__ == "__main__":
    key = jax.random.PRNGKey(0)
    k_img, k_wc, k_bc, k_wf, k_bf = jax.random.split(key, 5)

    images = jax.random.normal(k_img, (B, C_IN, H, W), dtype=jnp.float32)

    # Deterministic parameter init (kaiming-ish scaling).
    w_conv = jax.random.normal(k_wc, (K, K, C_IN, C_OUT), jnp.float32) * (
        1.0 / np.sqrt(K * K * C_IN))
    b_conv = jax.random.normal(k_bc, (C_OUT,), jnp.float32) * 0.01
    w_fc = jax.random.normal(k_wf, (C_OUT, NUM_CLASSES), jnp.float32) * (
        1.0 / np.sqrt(C_OUT))
    b_fc = jax.random.normal(k_bf, (NUM_CLASSES,), jnp.float32) * 0.01

    out = cnnfe_forward(images, w_conv, b_conv, w_fc, b_fc)
    out = jax.block_until_ready(out)

    ref = _reference_forward(images, w_conv, b_conv, w_fc, b_fc)
    if not np.allclose(np.asarray(out), np.asarray(ref), atol=1e-4, rtol=1e-4):
        raise AssertionError("Pallas kernel mismatch vs JAX reference")

    print("KERNEL_OK")
</pallas_src>

<mosaic_0001>
module attributes {stable_mosaic.version = 11 : i64} {
  func.func @_cnnfe_kernel(%arg0: i32, %arg1: memref<512x128xf32, #tpu.memory_space<vmem>>, %arg2: memref<128x128xf32, #tpu.memory_space<vmem>>, %arg3: memref<8x512xf32, #tpu.memory_space<vmem>>, %arg4: memref<128x128xf32, #tpu.memory_space<vmem>>, %arg5: memref<8x128xf32, #tpu.memory_space<vmem>>, %arg6: memref<8x128xf32, #tpu.memory_space<vmem>>) attributes {dimension_semantics = [#tpu.dimension_semantics<arbitrary>], iteration_bounds = array<i64: 1>, scalar_prefetch = 0 : i64, scratch_operands = 0 : i64, tpu.core_type = #tpu.core_type<tc>, window_params = [{pipeline_mode = #tpu.pipeline_mode<synchronous>, transform_indices = @transform_0, window_bounds = array<i64: 512, 128>}, {pipeline_mode = #tpu.pipeline_mode<synchronous>, transform_indices = @transform_1, window_bounds = array<i64: 128, 128>}, {pipeline_mode = #tpu.pipeline_mode<synchronous>, transform_indices = @transform_2, window_bounds = array<i64: 8, 512>}, {pipeline_mode = #tpu.pipeline_mode<synchronous>, transform_indices = @transform_3, window_bounds = array<i64: 128, 128>}, {pipeline_mode = #tpu.pipeline_mode<synchronous>, transform_indices = @transform_4, window_bounds = array<i64: 8, 128>}, {pipeline_mode = #tpu.pipeline_mode<synchronous>, transform_indices = @transform_5, window_bounds = array<i64: 8, 128>}]} {
    %c0 = arith.constant 0 : index
    %c0_0 = arith.constant 0 : index
    %0 = vector.load %arg1[%c0, %c0_0] : memref<512x128xf32, #tpu.memory_space<vmem>>, vector<512x128xf32>
    %c0_1 = arith.constant 0 : index
    %c0_2 = arith.constant 0 : index
    %1 = vector.load %arg2[%c0_1, %c0_2] : memref<128x128xf32, #tpu.memory_space<vmem>>, vector<128x128xf32>
    %cst = arith.constant dense<0.000000e+00> : vector<512x128xf32>
    %2 = tpu.matmul %0, %1, %cst {dimension_numbers = #tpu.dot_dimension_numbers<[1], [0], [0], [1], [0, 0, 1, 1], [], []>} : vector<512x128xf32>, vector<128x128xf32>, vector<512x128xf32> -> vector<512x128xf32>
    %cst_3 = arith.constant 0.000000e+00 : f32
    %3 = vector.broadcast %cst_3 : f32 to vector<512x128xf32>
    %4 = arith.maximumf %2, %3 : vector<512x128xf32>
    %c0_4 = arith.constant 0 : index
    %c0_5 = arith.constant 0 : index
    %5 = vector.load %arg3[%c0_4, %c0_5] : memref<8x512xf32, #tpu.memory_space<vmem>>, vector<8x512xf32>
    %cst_6 = arith.constant dense<0.000000e+00> : vector<8x128xf32>
    %6 = tpu.matmul %5, %4, %cst_6 {dimension_numbers = #tpu.dot_dimension_numbers<[1], [0], [0], [1], [0, 0, 1, 1], [], []>} : vector<8x512xf32>, vector<512x128xf32>, vector<8x128xf32> -> vector<8x128xf32>
    %c0_7 = arith.constant 0 : index
    %c0_8 = arith.constant 0 : index
    %7 = vector.load %arg4[%c0_7, %c0_8] : memref<128x128xf32, #tpu.memory_space<vmem>>, vector<128x128xf32>
    %cst_9 = arith.constant dense<0.000000e+00> : vector<8x128xf32>
    %8 = tpu.matmul %6, %7, %cst_9 {dimension_numbers = #tpu.dot_dimension_numbers<[1], [0], [0], [1], [0, 0, 1, 1], [], []>} : vector<8x128xf32>, vector<128x128xf32>, vector<8x128xf32> -> vector<8x128xf32>
    %c0_10 = arith.constant 0 : index
    %c0_11 = arith.constant 0 : index
    %9 = vector.load %arg5[%c0_10, %c0_11] : memref<8x128xf32, #tpu.memory_space<vmem>>, vector<8x128xf32>
    %10 = arith.addf %8, %9 : vector<8x128xf32>
    %c0_12 = arith.constant 0 : index
    %c0_13 = arith.constant 0 : index
    %11 = vector.load %arg6[%c0_12, %c0_13] : memref<8x128xf32, #tpu.memory_space<vmem>>, vector<8x128xf32>
    tpu.vector_store %arg6[%c0_12, %c0_13], %10 {strides = array<i32>} : memref<8x128xf32, #tpu.memory_space<vmem>>, vector<8x128xf32>,
    return
  }
  func.func @transform_0(%arg0: i32) -> (i32, i32) {
    %c0_i32 = arith.constant 0 : i32
    %c0_i32_0 = arith.constant 0 : i32
    %c0_i32_1 = arith.constant 0 : i32
    return %c0_i32, %c0_i32_0 : i32, i32
  }
  func.func @transform_1(%arg0: i32) -> (i32, i32) {
    %c0_i32 = arith.constant 0 : i32
    %c0_i32_0 = arith.constant 0 : i32
    %c0_i32_1 = arith.constant 0 : i32
    return %c0_i32, %c0_i32_0 : i32, i32
  }
  func.func @transform_2(%arg0: i32) -> (i32, i32) {
    %c0_i32 = arith.constant 0 : i32
    %c0_i32_0 = arith.constant 0 : i32
    %c0_i32_1 = arith.constant 0 : i32
    return %c0_i32, %c0_i32_0 : i32, i32
  }
  func.func @transform_3(%arg0: i32) -> (i32, i32) {
    %c0_i32 = arith.constant 0 : i32
    %c0_i32_0 = arith.constant 0 : i32
    %c0_i32_1 = arith.constant 0 : i32
    return %c0_i32, %c0_i32_0 : i32, i32
  }
  func.func @transform_4(%arg0: i32) -> (i32, i32) {
    %c0_i32 = arith.constant 0 : i32
    %c0_i32_0 = arith.constant 0 : i32
    %c0_i32_1 = arith.constant 0 : i32
    return %c0_i32, %c0_i32_0 : i32, i32
  }
  func.func @transform_5(%arg0: i32) -> (i32, i32) {
    %c0_i32 = arith.constant 0 : i32
    %c0_i32_0 = arith.constant 0 : i32
    %c0_i32_1 = arith.constant 0 : i32
    return %c0_i32, %c0_i32_0 : i32, i32
  }
}

</mosaic_0001>

<llo_original>
// kernel: tpu_custom_call.1
$region0: #{tpu_custom_call.1}
  #allocation0 [shape = 'u32[]', space=smem, size = 0x4, offset = 0x4, fixed_abs, tag = 'smem constant byte address 0x4 - core index']
  #allocation1 [shape = 'u32[144,128]{1,0:T(1,128)}', space=vmem, size = 0x12000, scoped, tag = 'internal scratch']
  %s0 = inlined_call_operand.hbm [shape: f32[512,128], index: 0, kind: input, shape index: {}]
  %s1 = inlined_call_operand.hbm [shape: f32[128,128], index: 1, kind: input, shape index: {}]
  %s2 = inlined_call_operand.hbm [shape: f32[8,512], index: 2, kind: input, shape index: {}]
  %s3 = inlined_call_operand.hbm [shape: f32[128,128], index: 3, kind: input, shape index: {}]
  %s4 = inlined_call_operand.hbm [shape: f32[8,128], index: 4, kind: input, shape index: {}]
  %s5 = inlined_call_operand.hbm [shape: f32[8,128], index: 5, kind: output, shape index: {}]
  %s6 = sld [smem:[#allocation0]]
  $region50: #{tpu_custom_call.1} parent=0
    _
  %s8 = ssub.s32 1, %s6
  %s9 = scalar_select 0, %s8, %s6
  $region1: #{tpu_custom_call.1} parent=0
    #allocation2 [shape = 'u8[262144]{0}', space=vmem, size = 0x40000, scoped, tag = 'input window, operand 0, single buffered']
    #allocation3 [shape = 's32[1]{0}', space=sflag, size = 0x4, scoped, tag = 'scoped memory for tpu_custom_call.1']
    #allocation4 [shape = 's32[1]{0}', space=sflag, size = 0x4, scoped, tag = 'scoped memory for tpu_custom_call.1']
    #allocation5 [shape = 'u8[65536]{0}', space=vmem, size = 0x10000, scoped, tag = 'input window, operand 1, single buffered']
    #allocation6 [shape = 's32[1]{0}', space=sflag, size = 0x4, scoped, tag = 'scoped memory for tpu_custom_call.1']
    #allocation7 [shape = 'u8[16384]{0}', space=vmem, size = 0x4000, scoped, tag = 'input window, operand 2, single buffered']
    #allocation8 [shape = 'u8[65536]{0}', space=vmem, size = 0x10000, scoped, tag = 'input window, operand 3, single buffered']
    #allocation9 [shape = 's32[1]{0}', space=sflag, size = 0x4, scoped, tag = 'scoped memory for tpu_custom_call.1']
    #allocation10 [shape = 'u8[4096]{0}', space=vmem, size = 0x1000, scoped, tag = 'input window, operand 4, single buffered']
    #allocation11 [shape = 'u8[4096]{0}', space=vmem, size = 0x1000, scoped, tag = 'output window, operand 0, single buffered']
    %10 = vsyncpa [#allocation3], 0
    %11 = vsyncpa [#allocation6], 0
    %12 = vsyncpa [#allocation9], 0
    %13 = vsyncpa [#allocation4], 0
    // Predicated region
    $region2: #{tpu_custom_call.1} parent=1 // pred_check
      _
    $region3: #{tpu_custom_call.1} parent=1 // pred_check_branch
      %15 = sbr.rel (0) target = $region5
    $region4: #{tpu_custom_call.1} parent=1 // pred_region
      %s17 = ssub.s32 8192, 8192
      %18 = vsyncadd [#allocation3], %s17
      %s19 = sshll.u32 [#allocation2], 4
      %s20 = int_to_ptr.vmem [resolvable:$true] %s19
      %25 = dma.hbm_to_vmem [thread:$0]  %s0, 8192, %s20, [#allocation3], 128, 128, 8
    $region5: #{tpu_custom_call.1} parent=1 // pred_fallthru
      _
    // Predicated region
    $region6: #{tpu_custom_call.1} parent=1 // pred_check
      _
    $region7: #{tpu_custom_call.1} parent=1 // pred_check_branch
      %27 = sbr.rel (0) target = $region9
    $region8: #{tpu_custom_call.1} parent=1 // pred_region
      %s29 = ssub.s32 2048, 2048
      %30 = vsyncadd [#allocation6], %s29
      %s31 = sshll.u32 [#allocation5], 4
      %s32 = int_to_ptr.vmem [resolvable:$true] %s31
      %37 = dma.hbm_to_vmem [thread:$0]  %s1, 2048, %s32, [#allocation6], 128, 128, 8
    $region9: #{tpu_custom_call.1} parent=1 // pred_fallthru
      _
    // Predicated region
    $region10: #{tpu_custom_call.1} parent=1 // pred_check
      _
    $region11: #{tpu_custom_call.1} parent=1 // pred_check_branch
      %39 = sbr.rel (0) target = $region13
    $region12: #{tpu_custom_call.1} parent=1 // pred_region
      %s41 = ssub.s32 512, 512
      %42 = vsyncadd [#allocation6], %s41
      %s44 = sshll.u32 [#allocation7], 4
      %s45 = int_to_ptr.vmem [resolvable:$true] %s44
      %47 = dma.hbm_to_vmem [thread:$0]  %s2, 512, %s45, [#allocation6]
    $region13: #{tpu_custom_call.1} parent=1 // pred_fallthru
      _
    // Predicated region
    $region14: #{tpu_custom_call.1} parent=1 // pred_check
      _
    $region15: #{tpu_custom_call.1} parent=1 // pred_check_branch
      %49 = sbr.rel (0) target = $region17
    $region16: #{tpu_custom_call.1} parent=1 // pred_region
      %s51 = ssub.s32 2048, 2048
      %52 = vsyncadd [#allocation9], %s51
      %s53 = sshll.u32 [#allocation8], 4
      %s54 = int_to_ptr.vmem [resolvable:$true] %s53
      %59 = dma.hbm_to_vmem [thread:$0]  %s3, 2048, %s54, [#allocation9], 128, 128, 8
    $region17: #{tpu_custom_call.1} parent=1 // pred_fallthru
      _
    // Predicated region
    $region18: #{tpu_custom_call.1} parent=1 // pred_check
      _
    $region19: #{tpu_custom_call.1} parent=1 // pred_check_branch
      %61 = sbr.rel (0) target = $region21
    $region20: #{tpu_custom_call.1} parent=1 // pred_region
      %s63 = ssub.s32 128, 128
      %64 = vsyncadd [#allocation9], %s63
      %s66 = sshll.u32 [#allocation10], 4
      %s67 = int_to_ptr.vmem [resolvable:$true] %s66
      %69 = dma.hbm_to_vmem [thread:$0]  %s4, 128, %s67, [#allocation9]
    $region21: #{tpu_custom_call.1} parent=1 // pred_fallthru
      _
    // Predicated region
    $region22: #{tpu_custom_call.1} parent=1 // pred_check
      _
    $region23: #{tpu_custom_call.1} parent=1 // pred_check_branch
      %71 = sbr.rel (0) target = $region25
    $region24: #{tpu_custom_call.1} parent=1 // pred_region
      %72 = dma.done [#allocation3], 8192
    $region25: #{tpu_custom_call.1} parent=1 // pred_fallthru
      _
    // Predicated region
    $region26: #{tpu_custom_call.1} parent=1 // pred_check
      _
    $region27: #{tpu_custom_call.1} parent=1 // pred_check_branch
      %74 = sbr.rel (0) target = $region29
    $region28: #{tpu_custom_call.1} parent=1 // pred_region
      %75 = dma.done [#allocation6], 2048
    $region29: #{tpu_custom_call.1} parent=1 // pred_fallthru
      _
    // Predicated region
    $region30: #{tpu_custom_call.1} parent=1 // pred_check
      _
    $region31: #{tpu_custom_call.1} parent=1 // pred_check_branch
      %77 = sbr.rel (0) target = $region33
    $region32: #{tpu_custom_call.1} parent=1 // pred_region
      %78 = dma.done [#allocation6], 512
    $region33: #{tpu_custom_call.1} parent=1 // pred_fallthru
      _
    // Predicated region
    $region34: #{tpu_custom_call.1} parent=1 // pred_check
      _
    $region35: #{tpu_custom_call.1} parent=1 // pred_check_branch
      %80 = sbr.rel (0) target = $region37
    $region36: #{tpu_custom_call.1} parent=1 // pred_region
      %81 = dma.done [#allocation9], 2048
    $region37: #{tpu_custom_call.1} parent=1 // pred_fallthru
      _
    // Predicated region
    $region38: #{tpu_custom_call.1} parent=1 // pred_check
      _
    $region39: #{tpu_custom_call.1} parent=1 // pred_check_branch
      %83 = sbr.rel (0) target = $region41
    $region40: #{tpu_custom_call.1} parent=1 // pred_region
      %84 = dma.done [#allocation9], 128
    $region41: #{tpu_custom_call.1} parent=1 // pred_fallthru
      _
    %v85 = vld [vmem:[#allocation2] sm:$0xff]
    %v86 = vld [vmem:[#allocation2 + $0x8] sm:$0xff]
    %v87 = vld [vmem:[#allocation2 + $0x10] sm:$0xff]
    %v88 = vld [vmem:[#allocation2 + $0x18] sm:$0xff]
    %v89 = vld [vmem:[#allocation2 + $0x20] sm:$0xff]
    %v90 = vld [vmem:[#allocation2 + $0x28] sm:$0xff]
    %v91 = vld [vmem:[#allocation2 + $0x30] sm:$0xff]
    %v92 = vld [vmem:[#allocation2 + $0x38] sm:$0xff]
    %v93 = vld [vmem:[#allocation2 + $0x40] sm:$0xff]
    %v94 = vld [vmem:[#allocation2 + $0x48] sm:$0xff]
    %v95 = vld [vmem:[#allocation2 + $0x50] sm:$0xff]
    %v96 = vld [vmem:[#allocation2 + $0x58] sm:$0xff]
    %v97 = vld [vmem:[#allocation2 + $0x60] sm:$0xff]
    %v98 = vld [vmem:[#allocation2 + $0x68] sm:$0xff]
    %v99 = vld [vmem:[#allocation2 + $0x70] sm:$0xff]
    %v100 = vld [vmem:[#allocation2 + $0x78] sm:$0xff]
    %v101 = vld [vmem:[#allocation2 + $0x80] sm:$0xff]
    %v102 = vld [vmem:[#allocation2 + $0x88] sm:$0xff]
    %v103 = vld [vmem:[#allocation2 + $0x90] sm:$0xff]
    %v104 = vld [vmem:[#allocation2 + $0x98] sm:$0xff]
    %v105 = vld [vmem:[#allocation2 + $0xa0] sm:$0xff]
    %v106 = vld [vmem:[#allocation2 + $0xa8] sm:$0xff]
    %v107 = vld [vmem:[#allocation2 + $0xb0] sm:$0xff]
    %v108 = vld [vmem:[#allocation2 + $0xb8] sm:$0xff]
    %v109 = vld [vmem:[#allocation2 + $0xc0] sm:$0xff]
    %v110 = vld [vmem:[#allocation2 + $0xc8] sm:$0xff]
    %v111 = vld [vmem:[#allocation2 + $0xd0] sm:$0xff]
    %v112 = vld [vmem:[#allocation2 + $0xd8] sm:$0xff]
    %v113 = vld [vmem:[#allocation2 + $0xe0] sm:$0xff]
    %v114 = vld [vmem:[#allocation2 + $0xe8] sm:$0xff]
    %v115 = vld [vmem:[#allocation2 + $0xf0] sm:$0xff]
    %v116 = vld [vmem:[#allocation2 + $0xf8] sm:$0xff]
    %v117 = vld [vmem:[#allocation2 + $0x100] sm:$0xff]
    %v118 = vld [vmem:[#allocation2 + $0x108] sm:$0xff]
    %v119 = vld [vmem:[#allocation2 + $0x110] sm:$0xff]
    %v120 = vld [vmem:[#allocation2 + $0x118] sm:$0xff]
    %v121 = vld [vmem:[#allocation2 + $0x120] sm:$0xff]
    %v122 = vld [vmem:[#allocation2 + $0x128] sm:$0xff]
    %v123 = vld [vmem:[#allocation2 + $0x130] sm:$0xff]
    %v124 = vld [vmem:[#allocation2 + $0x138] sm:$0xff]
    %v125 = vld [vmem:[#allocation2 + $0x140] sm:$0xff]
    %v126 = vld [vmem:[#allocation2 + $0x148] sm:$0xff]
    %v127 = vld [vmem:[#allocation2 + $0x150] sm:$0xff]
    %v128 = vld [vmem:[#allocation2 + $0x158] sm:$0xff]
    %v129 = vld [vmem:[#allocation2 + $0x160] sm:$0xff]
    %v130 = vld [vmem:[#allocation2 + $0x168] sm:$0xff]
    %v131 = vld [vmem:[#allocation2 + $0x170] sm:$0xff]
    %v132 = vld [vmem:[#allocation2 + $0x178] sm:$0xff]
    %v133 = vld [vmem:[#allocation2 + $0x180] sm:$0xff]
    %v134 = vld [vmem:[#allocation2 + $0x188] sm:$0xff]
    %v135 = vld [vmem:[#allocation2 + $0x190] sm:$0xff]
    %v136 = vld [vmem:[#allocation2 + $0x198] sm:$0xff]
    %v137 = vld [vmem:[#allocation2 + $0x1a0] sm:$0xff]
    %v138 = vld [vmem:[#allocation2 + $0x1a8] sm:$0xff]
    %v139 = vld [vmem:[#allocation2 + $0x1b0] sm:$0xff]
    %v140 = vld [vmem:[#allocation2 + $0x1b8] sm:$0xff]
    %v141 = vld [vmem:[#allocation2 + $0x1c0] sm:$0xff]
    %v142 = vld [vmem:[#allocation2 + $0x1c8] sm:$0xff]
    %v143 = vld [vmem:[#allocation2 + $0x1d0] sm:$0xff]
    %v144 = vld [vmem:[#allocation2 + $0x1d8] sm:$0xff]
    %v145 = vld [vmem:[#allocation2 + $0x1e0] sm:$0xff]
    %v146 = vld [vmem:[#allocation2 + $0x1e8] sm:$0xff]
    %v147 = vld [vmem:[#allocation2 + $0x1f0] sm:$0xff]
    %v148 = vld [vmem:[#allocation2 + $0x1f8] sm:$0xff]
    %v149 = vld [vmem:[#allocation5] sm:$0xff]
    %v150 = vld [vmem:[#allocation5 + $0x8] sm:$0xff]
    %v151 = vld [vmem:[#allocation5 + $0x10] sm:$0xff]
    %v152 = vld [vmem:[#allocation5 + $0x18] sm:$0xff]
    %v153 = vld [vmem:[#allocation5 + $0x20] sm:$0xff]
    %v154 = vld [vmem:[#allocation5 + $0x28] sm:$0xff]
    %v155 = vld [vmem:[#allocation5 + $0x30] sm:$0xff]
    %v156 = vld [vmem:[#allocation5 + $0x38] sm:$0xff]
    %v157 = vld [vmem:[#allocation5 + $0x40] sm:$0xff]
    %v158 = vld [vmem:[#allocation5 + $0x48] sm:$0xff]
    %v159 = vld [vmem:[#allocation5 + $0x50] sm:$0xff]
    %v160 = vld [vmem:[#allocation5 + $0x58] sm:$0xff]
    %v161 = vld [vmem:[#allocation5 + $0x60] sm:$0xff]
    %v162 = vld [vmem:[#allocation5 + $0x68] sm:$0xff]
    %v163 = vld [vmem:[#allocation5 + $0x70] sm:$0xff]
    %v164 = vld [vmem:[#allocation5 + $0x78] sm:$0xff]
    %165 = vmatprep.subr.mxu0 0.0
    %166 = vmatpush1.msra.mxu0 %v164
    %167 = vmatprep.subr.mxu0 0.0
    %168 = vmatpush1.msra.mxu0 %v163
    %169 = vmatprep.subr.mxu0 0.0
    %170 = vmatpush1.msra.mxu0 %v162
    %171 = vmatprep.subr.mxu0 0.0
    %172 = vmatpush1.msra.mxu0 %v161
    %173 = vmatprep.subr.mxu0 0.0
    %174 = vmatpush1.msra.mxu0 %v160
    %175 = vmatprep.subr.mxu0 0.0
    %176 = vmatpush1.msra.mxu0 %v159
    %177 = vmatprep.subr.mxu0 0.0
    %178 = vmatpush1.msra.mxu0 %v158
    %179 = vmatprep.subr.mxu0 0.0
    %180 = vmatpush1.msra.mxu0 %v157
    %181 = vmatprep.subr.mxu0 0.0
    %182 = vmatpush1.msra.mxu0 %v156
    %183 = vmatprep.subr.mxu0 0.0
    %184 = vmatpush1.msra.mxu0 %v155
    %185 = vmatprep.subr.mxu0 0.0
    %186 = vmatpush1.msra.mxu0 %v154
    %187 = vmatprep.subr.mxu0 0.0
    %188 = vmatpush1.msra.mxu0 %v153
    %189 = vmatprep.subr.mxu0 0.0
    %190 = vmatpush1.msra.mxu0 %v152
    %191 = vmatprep.subr.mxu0 0.0
    %192 = vmatpush1.msra.mxu0 %v151
    %193 = vmatprep.subr.mxu0 0.0
    %194 = vmatpush1.msra.mxu0 %v150
    %195 = vmatprep.subr.mxu0 0.0
    %196 = vmatpush1.msra.mxu0 %v149
    %197 = vmatprep.subr.mxu0 0.0
    %198 = vmatpush2.msra.mxu0 0.0
    %199 = vmatprep.subr.mxu0 0.0
    %200 = vmatpush2.msra.mxu0 0.0
    %201 = vmatprep.subr.mxu0 0.0
    %202 = vmatpush2.msra.mxu0 0.0
    %203 = vmatprep.subr.mxu0 0.0
    %204 = vmatpush2.msra.mxu0 0.0
    %205 = vmatprep.subr.mxu0 0.0
    %206 = vmatpush2.msra.mxu0 0.0
    %207 = vmatprep.subr.mxu0 0.0
    %208 = vmatpush2.msra.mxu0 0.0
    %209 = vmatprep.subr.mxu0 0.0
    %210 = vmatpush2.msra.mxu0 0.0
    %211 = vmatprep.subr.mxu0 0.0
    %212 = vmatpush2.msra.mxu0 0.0
    %213 = vmatprep.subr.mxu0 0.0
    %214 = vmatpush2.msra.mxu0 0.0
    %215 = vmatprep.subr.mxu0 0.0
    %216 = vmatpush2.msra.mxu0 0.0
    %217 = vmatprep.subr.mxu0 0.0
    %218 = vmatpush2.msra.mxu0 0.0
    %219 = vmatprep.subr.mxu0 0.0
    %220 = vmatpush2.msra.mxu0 0.0
    %221 = vmatprep.subr.mxu0 0.0
    %222 = vmatpush2.msra.mxu0 0.0
    %223 = vmatprep.subr.mxu0 0.0
    %224 = vmatpush2.msra.mxu0 0.0
    %225 = vmatprep.subr.mxu0 0.0
    %226 = vmatpush2.msra.mxu0 0.0
    %227 = vmatprep.subr.mxu0 0.0
    %228 = vmatpush2.msra.mxu0 0.0
    %229 = vmatprep.mubr.f32.mxu0 0.0
    %230 = vmatmul.mubr.f32.gmra.mxu0 %v85
    %v231 = vpop.f32.mrf.mxu0
    %v232 = vadd.f32 0.0, %v231
    %v233 = vpop.f32.mrf.mxu0
    %234 = vmatprep.mubr.f32.mxu0 0.0
    %235 = vmatmul.mubr.f32.gmra.mxu0 %v86
    %v236 = vpop.f32.mrf.mxu0
    %v237 = vadd.f32 0.0, %v236
    %v238 = vpop.f32.mrf.mxu0
    %239 = vmatprep.mubr.f32.mxu0 0.0
    %240 = vmatmul.mubr.f32.gmra.mxu0 %v87
    %v241 = vpop.f32.mrf.mxu0
    %v242 = vadd.f32 0.0, %v241
    %v243 = vpop.f32.mrf.mxu0
    %244 = vmatprep.mubr.f32.mxu0 0.0
    %245 = vmatmul.mubr.f32.gmra.mxu0 %v88
    %v246 = vpop.f32.mrf.mxu0
    %v247 = vadd.f32 0.0, %v246
    %v248 = vpop.f32.mrf.mxu0
    %249 = vmatprep.mubr.f32.mxu0 0.0
    %250 = vmatmul.mubr.f32.gmra.mxu0 %v89
    %v251 = vpop.f32.mrf.mxu0
    %v252 = vadd.f32 0.0, %v251
    %v253 = vpop.f32.mrf.mxu0
    %254 = vmatprep.mubr.f32.mxu0 0.0
    %255 = vmatmul.mubr.f32.gmra.mxu0 %v90
    %v256 = vpop.f32.mrf.mxu0
    %v257 = vadd.f32 0.0, %v256
    %v258 = vpop.f32.mrf.mxu0
    %259 = vmatprep.mubr.f32.mxu0 0.0
    %260 = vmatmul.mubr.f32.gmra.mxu0 %v91
    %v261 = vpop.f32.mrf.mxu0
    %v262 = vadd.f32 0.0, %v261
    %v263 = vpop.f32.mrf.mxu0
    %264 = vmatprep.mubr.f32.mxu0 0.0
    %265 = vmatmul.mubr.f32.gmra.mxu0 %v92
    %v266 = vpop.f32.mrf.mxu0
    %v267 = vadd.f32 0.0, %v266
    %v268 = vpop.f32.mrf.mxu0
    %269 = vmatprep.mubr.f32.mxu0 0.0
    %270 = vmatmul.mubr.f32.gmra.mxu0 %v93
    %v271 = vpop.f32.mrf.mxu0
    %v272 = vadd.f32 0.0, %v271
    %v273 = vpop.f32.mrf.mxu0
    %274 = vmatprep.mubr.f32.mxu0 0.0
    %275 = vmatmul.mubr.f32.gmra.mxu0 %v94
    %v276 = vpop.f32.mrf.mxu0
    %v277 = vadd.f32 0.0, %v276
    %v278 = vpop.f32.mrf.mxu0
    %279 = vmatprep.mubr.f32.mxu0 0.0
    %280 = vmatmul.mubr.f32.gmra.mxu0 %v95
    %v281 = vpop.f32.mrf.mxu0
    %v282 = vadd.f32 0.0, %v281
    %v283 = vpop.f32.mrf.mxu0
    %284 = vmatprep.mubr.f32.mxu0 0.0
    %285 = vmatmul.mubr.f32.gmra.mxu0 %v96
    %v286 = vpop.f32.mrf.mxu0
    %v287 = vadd.f32 0.0, %v286
    %v288 = vpop.f32.mrf.mxu0
    %289 = vmatprep.mubr.f32.mxu0 0.0
    %290 = vmatmul.mubr.f32.gmra.mxu0 %v97
    %v291 = vpop.f32.mrf.mxu0
    %v292 = vadd.f32 0.0, %v291
    %v293 = vpop.f32.mrf.mxu0
    %294 = vmatprep.mubr.f32.mxu0 0.0
    %295 = vmatmul.mubr.f32.gmra.mxu0 %v98
    %v296 = vpop.f32.mrf.mxu0
    %v297 = vadd.f32 0.0, %v296
    %v298 = vpop.f32.mrf.mxu0
    %299 = vmatprep.mubr.f32.mxu0 0.0
    %300 = vmatmul.mubr.f32.gmra.mxu0 %v99
    %v301 = vpop.f32.mrf.mxu0
    %v302 = vadd.f32 0.0, %v301
    %v303 = vpop.f32.mrf.mxu0
    %304 = vmatprep.mubr.f32.mxu0 0.0
    %305 = vmatmul.mubr.f32.gmra.mxu0 %v100
    %v306 = vpop.f32.mrf.mxu0
    %v307 = vadd.f32 0.0, %v306
    %v308 = vpop.f32.mrf.mxu0
    %309 = vmatprep.mubr.f32.mxu0 0.0
    %310 = vmatmul.mubr.f32.gmra.mxu0 %v101
    %v311 = vpop.f32.mrf.mxu0
    %v312 = vadd.f32 0.0, %v311
    %v313 = vpop.f32.mrf.mxu0
    %314 = vmatprep.mubr.f32.mxu0 0.0
    %315 = vmatmul.mubr.f32.gmra.mxu0 %v102
    %v316 = vpop.f32.mrf.mxu0
    %v317 = vadd.f32 0.0, %v316
    %v318 = vpop.f32.mrf.mxu0
    %319 = vmatprep.mubr.f32.mxu0 0.0
    %320 = vmatmul.mubr.f32.gmra.mxu0 %v103
    %v321 = vpop.f32.mrf.mxu0
    %v322 = vadd.f32 0.0, %v321
    %v323 = vpop.f32.mrf.mxu0
    %324 = vmatprep.mubr.f32.mxu0 0.0
    %325 = vmatmul.mubr.f32.gmra.mxu0 %v104
    %v326 = vpop.f32.mrf.mxu0
    %v327 = vadd.f32 0.0, %v326
    %v328 = vpop.f32.mrf.mxu0
    %329 = vmatprep.mubr.f32.mxu0 0.0
    %330 = vmatmul.mubr.f32.gmra.mxu0 %v105
    %v331 = vpop.f32.mrf.mxu0
    %v332 = vadd.f32 0.0, %v331
    %v333 = vpop.f32.mrf.mxu0
    %334 = vmatprep.mubr.f32.mxu0 0.0
    %335 = vmatmul.mubr.f32.gmra.mxu0 %v106
    %v336 = vpop.f32.mrf.mxu0
    %v337 = vadd.f32 0.0, %v336
    %v338 = vpop.f32.mrf.mxu0
    %339 = vmatprep.mubr.f32.mxu0 0.0
    %340 = vmatmul.mubr.f32.gmra.mxu0 %v107
    %v341 = vpop.f32.mrf.mxu0
    %v342 = vadd.f32 0.0, %v341
    %v343 = vpop.f32.mrf.mxu0
    %344 = vmatprep.mubr.f32.mxu0 0.0
    %345 = vmatmul.mubr.f32.gmra.mxu0 %v108
    %v346 = vpop.f32.mrf.mxu0
    %v347 = vadd.f32 0.0, %v346
    %v348 = vpop.f32.mrf.mxu0
    %349 = vmatprep.mubr.f32.mxu0 0.0
    %350 = vmatmul.mubr.f32.gmra.mxu0 %v109
    %v351 = vpop.f32.mrf.mxu0
    %v352 = vadd.f32 0.0, %v351
    %v353 = vpop.f32.mrf.mxu0
    %354 = vmatprep.mubr.f32.mxu0 0.0
    %355 = vmatmul.mubr.f32.gmra.mxu0 %v110
    %v356 = vpop.f32.mrf.mxu0
    %v357 = vadd.f32 0.0, %v356
    %v358 = vpop.f32.mrf.mxu0
    %359 = vmatprep.mubr.f32.mxu0 0.0
    %360 = vmatmul.mubr.f32.gmra.mxu0 %v111
    %v361 = vpop.f32.mrf.mxu0
    %v362 = vadd.f32 0.0, %v361
    %v363 = vpop.f32.mrf.mxu0
    %364 = vmatprep.mubr.f32.mxu0 0.0
    %365 = vmatmul.mubr.f32.gmra.mxu0 %v112
    %v366 = vpop.f32.mrf.mxu0
    %v367 = vadd.f32 0.0, %v366
    %v368 = vpop.f32.mrf.mxu0
    %369 = vmatprep.mubr.f32.mxu0 0.0
    %370 = vmatmul.mubr.f32.gmra.mxu0 %v113
    %v371 = vpop.f32.mrf.mxu0
    %v372 = vadd.f32 0.0, %v371
    %v373 = vpop.f32.mrf.mxu0
    %374 = vmatprep.mubr.f32.mxu0 0.0
    %375 = vmatmul.mubr.f32.gmra.mxu0 %v114
    %v376 = vpop.f32.mrf.mxu0
    %v377 = vadd.f32 0.0, %v376
    %v378 = vpop.f32.mrf.mxu0
    %379 = vmatprep.mubr.f32.mxu0 0.0
    %380 = vmatmul.mubr.f32.gmra.mxu0 %v115
    %v381 = vpop.f32.mrf.mxu0
    %v382 = vadd.f32 0.0, %v381
    %v383 = vpop.f32.mrf.mxu0
    %384 = vmatprep.mubr.f32.mxu0 0.0
    %385 = vmatmul.mubr.f32.gmra.mxu0 %v116
    %v386 = vpop.f32.mrf.mxu0
    %v387 = vadd.f32 0.0, %v386
    %v388 = vpop.f32.mrf.mxu0
    %389 = vmatprep.mubr.f32.mxu0 0.0
    %390 = vmatmul.mubr.f32.gmra.mxu0 %v117
    %v391 = vpop.f32.mrf.mxu0
    %v392 = vadd.f32 0.0, %v391
    %v393 = vpop.f32.mrf.mxu0
    %394 = vmatprep.mubr.f32.mxu0 0.0
    %395 = vmatmul.mubr.f32.gmra.mxu0 %v118
    %v396 = vpop.f32.mrf.mxu0
    %v397 = vadd.f32 0.0, %v396
    %v398 = vpop.f32.mrf.mxu0
    %399 = vmatprep.mubr.f32.mxu0 0.0
    %400 = vmatmul.mubr.f32.gmra.mxu0 %v119
    %v401 = vpop.f32.mrf.mxu0
    %v402 = vadd.f32 0.0, %v401
    %v403 = vpop.f32.mrf.mxu0
    %404 = vmatprep.mubr.f32.mxu0 0.0
    %405 = vmatmul.mubr.f32.gmra.mxu0 %v120
    %v406 = vpop.f32.mrf.mxu0
    %v407 = vadd.f32 0.0, %v406
    %v408 = vpop.f32.mrf.mxu0
    %409 = vmatprep.mubr.f32.mxu0 0.0
    %410 = vmatmul.mubr.f32.gmra.mxu0 %v121
    %v411 = vpop.f32.mrf.mxu0
    %v412 = vadd.f32 0.0, %v411
    %v413 = vpop.f32.mrf.mxu0
    %414 = vmatprep.mubr.f32.mxu0 0.0
    %415 = vmatmul.mubr.f32.gmra.mxu0 %v122
    %v416 = vpop.f32.mrf.mxu0
    %v417 = vadd.f32 0.0, %v416
    %v418 = vpop.f32.mrf.mxu0
    %419 = vmatprep.mubr.f32.mxu0 0.0
    %420 = vmatmul.mubr.f32.gmra.mxu0 %v123
    %v421 = vpop.f32.mrf.mxu0
    %v422 = vadd.f32 0.0, %v421
    %v423 = vpop.f32.mrf.mxu0
    %424 = vmatprep.mubr.f32.mxu0 0.0
    %425 = vmatmul.mubr.f32.gmra.mxu0 %v124
    %v426 = vpop.f32.mrf.mxu0
    %v427 = vadd.f32 0.0, %v426
    %v428 = vpop.f32.mrf.mxu0
    %429 = vmatprep.mubr.f32.mxu0 0.0
    %430 = vmatmul.mubr.f32.gmra.mxu0 %v125
    %v431 = vpop.f32.mrf.mxu0
    %v432 = vadd.f32 0.0, %v431
    %v433 = vpop.f32.mrf.mxu0
    %434 = vmatprep.mubr.f32.mxu0 0.0
    %435 = vmatmul.mubr.f32.gmra.mxu0 %v126
    %v436 = vpop.f32.mrf.mxu0
    %v437 = vadd.f32 0.0, %v436
    %v438 = vpop.f32.mrf.mxu0
    %439 = vmatprep.mubr.f32.mxu0 0.0
    %440 = vmatmul.mubr.f32.gmra.mxu0 %v127
    %v441 = vpop.f32.mrf.mxu0
    %v442 = vadd.f32 0.0, %v441
    %v443 = vpop.f32.mrf.mxu0
    %444 = vmatprep.mubr.f32.mxu0 0.0
    %445 = vmatmul.mubr.f32.gmra.mxu0 %v128
    %v446 = vpop.f32.mrf.mxu0
    %v447 = vadd.f32 0.0, %v446
    %v448 = vpop.f32.mrf.mxu0
    %449 = vmatprep.mubr.f32.mxu0 0.0
    %450 = vmatmul.mubr.f32.gmra.mxu0 %v129
    %v451 = vpop.f32.mrf.mxu0
    %v452 = vadd.f32 0.0, %v451
    %v453 = vpop.f32.mrf.mxu0
    %454 = vmatprep.mubr.f32.mxu0 0.0
    %455 = vmatmul.mubr.f32.gmra.mxu0 %v130
    %v456 = vpop.f32.mrf.mxu0
    %v457 = vadd.f32 0.0, %v456
    %v458 = vpop.f32.mrf.mxu0
    %459 = vmatprep.mubr.f32.mxu0 0.0
    %460 = vmatmul.mubr.f32.gmra.mxu0 %v131
    %v461 = vpop.f32.mrf.mxu0
    %v462 = vadd.f32 0.0, %v461
    %v463 = vpop.f32.mrf.mxu0
    %464 = vmatprep.mubr.f32.mxu0 0.0
    %465 = vmatmul.mubr.f32.gmra.mxu0 %v132
    %v466 = vpop.f32.mrf.mxu0
    %v467 = vadd.f32 0.0, %v466
    %v468 = vpop.f32.mrf.mxu0
    %469 = vmatprep.mubr.f32.mxu0 0.0
    %470 = vmatmul.mubr.f32.gmra.mxu0 %v133
    %v471 = vpop.f32.mrf.mxu0
    %v472 = vadd.f32 0.0, %v471
    %v473 = vpop.f32.mrf.mxu0
    %474 = vmatprep.mubr.f32.mxu0 0.0
    %475 = vmatmul.mubr.f32.gmra.mxu0 %v134
    %v476 = vpop.f32.mrf.mxu0
    %v477 = vadd.f32 0.0, %v476
    %v478 = vpop.f32.mrf.mxu0
    %479 = vmatprep.mubr.f32.mxu0 0.0
    %480 = vmatmul.mubr.f32.gmra.mxu0 %v135
    %v481 = vpop.f32.mrf.mxu0
    %v482 = vadd.f32 0.0, %v481
    %v483 = vpop.f32.mrf.mxu0
    %484 = vmatprep.mubr.f32.mxu0 0.0
    %485 = vmatmul.mubr.f32.gmra.mxu0 %v136
    %v486 = vpop.f32.mrf.mxu0
    %v487 = vadd.f32 0.0, %v486
    %v488 = vpop.f32.mrf.mxu0
    %489 = vmatprep.mubr.f32.mxu0 0.0
    %490 = vmatmul.mubr.f32.gmra.mxu0 %v137
    %v491 = vpop.f32.mrf.mxu0
    %v492 = vadd.f32 0.0, %v491
    %v493 = vpop.f32.mrf.mxu0
    %494 = vmatprep.mubr.f32.mxu0 0.0
    %495 = vmatmul.mubr.f32.gmra.mxu0 %v138
    %v496 = vpop.f32.mrf.mxu0
    %v497 = vadd.f32 0.0, %v496
    %v498 = vpop.f32.mrf.mxu0
    %499 = vmatprep.mubr.f32.mxu0 0.0
    %500 = vmatmul.mubr.f32.gmra.mxu0 %v139
    %v501 = vpop.f32.mrf.mxu0
    %v502 = vadd.f32 0.0, %v501
    %v503 = vpop.f32.mrf.mxu0
    %504 = vmatprep.mubr.f32.mxu0 0.0
    %505 = vmatmul.mubr.f32.gmra.mxu0 %v140
    %v506 = vpop.f32.mrf.mxu0
    %v507 = vadd.f32 0.0, %v506
    %v508 = vpop.f32.mrf.mxu0
    %509 = vmatprep.mubr.f32.mxu0 0.0
    %510 = vmatmul.mubr.f32.gmra.mxu0 %v141
    %v511 = vpop.f32.mrf.mxu0
    %v512 = vadd.f32 0.0, %v511
    %v513 = vpop.f32.mrf.mxu0
    %514 = vmatprep.mubr.f32.mxu0 0.0
    %515 = vmatmul.mubr.f32.gmra.mxu0 %v142
    %v516 = vpop.f32.mrf.mxu0
    %v517 = vadd.f32 0.0, %v516
    %v518 = vpop.f32.mrf.mxu0
    %519 = vmatprep.mubr.f32.mxu0 0.0
    %520 = vmatmul.mubr.f32.gmra.mxu0 %v143
    %v521 = vpop.f32.mrf.mxu0
    %v522 = vadd.f32 0.0, %v521
    %v523 = vpop.f32.mrf.mxu0
    %524 = vmatprep.mubr.f32.mxu0 0.0
    %525 = vmatmul.mubr.f32.gmra.mxu0 %v144
    %v526 = vpop.f32.mrf.mxu0
    %v527 = vadd.f32 0.0, %v526
    %v528 = vpop.f32.mrf.mxu0
    %529 = vmatprep.mubr.f32.mxu0 0.0
    %530 = vmatmul.mubr.f32.gmra.mxu0 %v145
    %v531 = vpop.f32.mrf.mxu0
    %v532 = vadd.f32 0.0, %v531
    %v533 = vpop.f32.mrf.mxu0
    %534 = vmatprep.mubr.f32.mxu0 0.0
    %535 = vmatmul.mubr.f32.gmra.mxu0 %v146
    %v536 = vpop.f32.mrf.mxu0
    %v537 = vadd.f32 0.0, %v536
    %v538 = vpop.f32.mrf.mxu0
    %539 = vmatprep.mubr.f32.mxu0 0.0
    %540 = vmatmul.mubr.f32.gmra.mxu0 %v147
    %v541 = vpop.f32.mrf.mxu0
    %v542 = vadd.f32 0.0, %v541
    %v543 = vpop.f32.mrf.mxu0
    %544 = vmatprep.mubr.f32.mxu0 0.0
    %545 = vmatmul.mubr.f32.gmra.mxu0 %v148
    %v546 = vpop.f32.mrf.mxu0
    %v547 = vadd.f32 0.0, %v546
    %v548 = vpop.f32.mrf.mxu0
    %549 = vdwg.mxu0
    %v550 = vmax.f32 %v232, 0.0
    %v551 = vmax.f32 %v237, 0.0
    %v552 = vmax.f32 %v242, 0.0
    %v553 = vmax.f32 %v247, 0.0
    %v554 = vmax.f32 %v252, 0.0
    %v555 = vmax.f32 %v257, 0.0
    %v556 = vmax.f32 %v262, 0.0
    %v557 = vmax.f32 %v267, 0.0
    %v558 = vmax.f32 %v272, 0.0
    %v559 = vmax.f32 %v277, 0.0
    %v560 = vmax.f32 %v282, 0.0
    %v561 = vmax.f32 %v287, 0.0
    %v562 = vmax.f32 %v292, 0.0
    %v563 = vmax.f32 %v297, 0.0
    %v564 = vmax.f32 %v302, 0.0
    %v565 = vmax.f32 %v307, 0.0
    %v566 = vmax.f32 %v312, 0.0
    %v567 = vmax.f32 %v317, 0.0
    %v568 = vmax.f32 %v322, 0.0
    %v569 = vmax.f32 %v327, 0.0
    %v570 = vmax.f32 %v332, 0.0
    %v571 = vmax.f32 %v337, 0.0
    %v572 = vmax.f32 %v342, 0.0
    %v573 = vmax.f32 %v347, 0.0
    %v574 = vmax.f32 %v352, 0.0
    %v575 = vmax.f32 %v357, 0.0
    %v576 = vmax.f32 %v362, 0.0
    %v577 = vmax.f32 %v367, 0.0
    %v578 = vmax.f32 %v372, 0.0
    %v579 = vmax.f32 %v377, 0.0
    %v580 = vmax.f32 %v382, 0.0
    %v581 = vmax.f32 %v387, 0.0
    %v582 = vmax.f32 %v392, 0.0
    %v583 = vmax.f32 %v397, 0.0
    %v584 = vmax.f32 %v402, 0.0
    %v585 = vmax.f32 %v407, 0.0
    %v586 = vmax.f32 %v412, 0.0
    %v587 = vmax.f32 %v417, 0.0
    %v588 = vmax.f32 %v422, 0.0
    %v589 = vmax.f32 %v427, 0.0
    %v590 = vmax.f32 %v432, 0.0
    %v591 = vmax.f32 %v437, 0.0
    %v592 = vmax.f32 %v442, 0.0
    %v593 = vmax.f32 %v447, 0.0
    %v594 = vmax.f32 %v452, 0.0
    %v595 = vmax.f32 %v457, 0.0
    %v596 = vmax.f32 %v462, 0.0
    %v597 = vmax.f32 %v467, 0.0
    %v598 = vmax.f32 %v472, 0.0
    %v599 = vmax.f32 %v477, 0.0
    %v600 = vmax.f32 %v482, 0.0
    %v601 = vmax.f32 %v487, 0.0
    %v602 = vmax.f32 %v492, 0.0
    %v603 = vmax.f32 %v497, 0.0
    %v604 = vmax.f32 %v502, 0.0
    %v605 = vmax.f32 %v507, 0.0
    %v606 = vmax.f32 %v512, 0.0
    %v607 = vmax.f32 %v517, 0.0
    %v608 = vmax.f32 %v522, 0.0
    %v609 = vmax.f32 %v527, 0.0
    %v610 = vmax.f32 %v532, 0.0
    %v611 = vmax.f32 %v537, 0.0
    %v612 = vmax.f32 %v542, 0.0
    %v613 = vmax.f32 %v547, 0.0
    %v614 = vld [vmem:[#allocation7] sm:$0xff]
    %v615 = vld [vmem:[#allocation7 + $0x8] sm:$0xff]
    %v616 = vld [vmem:[#allocation7 + $0x10] sm:$0xff]
    %v617 = vld [vmem:[#allocation7 + $0x18] sm:$0xff]
    %618 = vmatprep.subr.mxu0 0.0
    %619 = vmatpush1.msra.mxu0 %v565
    %620 = vmatprep.subr.mxu0 0.0
    %621 = vmatpush1.msra.mxu0 %v564
    %622 = vmatprep.subr.mxu0 0.0
    %623 = vmatpush1.msra.mxu0 %v563
    %624 = vmatprep.subr.mxu0 0.0
    %625 = vmatpush1.msra.mxu0 %v562
    %626 = vmatprep.subr.mxu0 0.0
    %627 = vmatpush1.msra.mxu0 %v561
    %628 = vmatprep.subr.mxu0 0.0
    %629 = vmatpush1.msra.mxu0 %v560
    %630 = vmatprep.subr.mxu0 0.0
    %631 = vmatpush1.msra.mxu0 %v559
    %632 = vmatprep.subr.mxu0 0.0
    %633 = vmatpush1.msra.mxu0 %v558
    %634 = vmatprep.subr.mxu0 0.0
    %635 = vmatpush1.msra.mxu0 %v557
    %636 = vmatprep.subr.mxu0 0.0
    %637 = vmatpush1.msra.mxu0 %v556
    %638 = vmatprep.subr.mxu0 0.0
    %639 = vmatpush1.msra.mxu0 %v555
    %640 = vmatprep.subr.mxu0 0.0
    %641 = vmatpush1.msra.mxu0 %v554
    %642 = vmatprep.subr.mxu0 0.0
    %643 = vmatpush1.msra.mxu0 %v553
    %644 = vmatprep.subr.mxu0 0.0
    %645 = vmatpush1.msra.mxu0 %v552
    %646 = vmatprep.subr.mxu0 0.0
    %647 = vmatpush1.msra.mxu0 %v551
    %648 = vmatprep.subr.mxu0 0.0
    %649 = vmatpush1.msra.mxu0 %v550
    %650 = vmatprep.subr.mxu0 0.0
    %651 = vmatpush2.msra.mxu0 %v581
    %652 = vmatprep.subr.mxu0 0.0
    %653 = vmatpush2.msra.mxu0 %v580
    %654 = vmatprep.subr.mxu0 0.0
    %655 = vmatpush2.msra.mxu0 %v579
    %656 = vmatprep.subr.mxu0 0.0
    %657 = vmatpush2.msra.mxu0 %v578
    %658 = vmatprep.subr.mxu0 0.0
    %659 = vmatpush2.msra.mxu0 %v577
    %660 = vmatprep.subr.mxu0 0.0
    %661 = vmatpush2.msra.mxu0 %v576
    %662 = vmatprep.subr.mxu0 0.0
    %663 = vmatpush2.msra.mxu0 %v575
    %664 = vmatprep.subr.mxu0 0.0
    %665 = vmatpush2.msra.mxu0 %v574
    %666 = vmatprep.subr.mxu0 0.0
    %667 = vmatpush2.msra.mxu0 %v573
    %668 = vmatprep.subr.mxu0 0.0
    %669 = vmatpush2.msra.mxu0 %v572
    %670 = vmatprep.subr.mxu0 0.0
    %671 = vmatpush2.msra.mxu0 %v571
    %672 = vmatprep.subr.mxu0 0.0
    %673 = vmatpush2.msra.mxu0 %v570
    %674 = vmatprep.subr.mxu0 0.0
    %675 = vmatpush2.msra.mxu0 %v569
    %676 = vmatprep.subr.mxu0 0.0
    %677 = vmatpush2.msra.mxu0 %v568
    %678 = vmatprep.subr.mxu0 0.0
    %679 = vmatpush2.msra.mxu0 %v567
    %680 = vmatprep.subr.mxu0 0.0
    %681 = vmatpush2.msra.mxu0 %v566
    %682 = vmatprep.mubr.f32.mxu0 %v615
    %683 = vmatmul.mubr.f32.gmra.mxu0 %v614
    %v684 = vpop.f32.mrf.mxu0
    %v685 = vadd.f32 0.0, %v684
    %v686 = vpop.f32.mrf.mxu0
    %687 = vdwg.mxu0
    %688 = vmatprep.subr.mxu0 0.0
    %689 = vmatpush1.msra.mxu0 %v597
    %690 = vmatprep.subr.mxu0 0.0
    %691 = vmatpush1.msra.mxu0 %v596
    %692 = vmatprep.subr.mxu0 0.0
    %693 = vmatpush1.msra.mxu0 %v595
    %694 = vmatprep.subr.mxu0 0.0
    %695 = vmatpush1.msra.mxu0 %v594
    %696 = vmatprep.subr.mxu0 0.0
    %697 = vmatpush1.msra.mxu0 %v593
    %698 = vmatprep.subr.mxu0 0.0
    %699 = vmatpush1.msra.mxu0 %v592
    %700 = vmatprep.subr.mxu0 0.0
    %701 = vmatpush1.msra.mxu0 %v591
    %702 = vmatprep.subr.mxu0 0.0
    %703 = vmatpush1.msra.mxu0 %v590
    %704 = vmatprep.subr.mxu0 0.0
    %705 = vmatpush1.msra.mxu0 %v589
    %706 = vmatprep.subr.mxu0 0.0
    %707 = vmatpush1.msra.mxu0 %v588
    %708 = vmatprep.subr.mxu0 0.0
    %709 = vmatpush1.msra.mxu0 %v587
    %710 = vmatprep.subr.mxu0 0.0
    %711 = vmatpush1.msra.mxu0 %v586
    %712 = vmatprep.subr.mxu0 0.0
    %713 = vmatpush1.msra.mxu0 %v585
    %714 = vmatprep.subr.mxu0 0.0
    %715 = vmatpush1.msra.mxu0 %v584
    %716 = vmatprep.subr.mxu0 0.0
    %717 = vmatpush1.msra.mxu0 %v583
    %718 = vmatprep.subr.mxu0 0.0
    %719 = vmatpush1.msra.mxu0 %v582
    %720 = vmatprep.subr.mxu0 0.0
    %721 = vmatpush2.msra.mxu0 %v613
    %722 = vmatprep.subr.mxu0 0.0
    %723 = vmatpush2.msra.mxu0 %v612
    %724 = vmatprep.subr.mxu0 0.0
    %725 = vmatpush2.msra.mxu0 %v611
    %726 = vmatprep.subr.mxu0 0.0
    %727 = vmatpush2.msra.mxu0 %v610
    %728 = vmatprep.subr.mxu0 0.0
    %729 = vmatpush2.msra.mxu0 %v609
    %730 = vmatprep.subr.mxu0 0.0
    %731 = vmatpush2.msra.mxu0 %v608
    %732 = vmatprep.subr.mxu0 0.0
    %733 = vmatpush2.msra.mxu0 %v607
    %734 = vmatprep.subr.mxu0 0.0
    %735 = vmatpush2.msra.mxu0 %v606
    %736 = vmatprep.subr.mxu0 0.0
    %737 = vmatpush2.msra.mxu0 %v605
    %738 = vmatprep.subr.mxu0 0.0
    %739 = vmatpush2.msra.mxu0 %v604
    %740 = vmatprep.subr.mxu0 0.0
    %741 = vmatpush2.msra.mxu0 %v603
    %742 = vmatprep.subr.mxu0 0.0
    %743 = vmatpush2.msra.mxu0 %v602
    %744 = vmatprep.subr.mxu0 0.0
    %745 = vmatpush2.msra.mxu0 %v601
    %746 = vmatprep.subr.mxu0 0.0
    %747 = vmatpush2.msra.mxu0 %v600
    %748 = vmatprep.subr.mxu0 0.0
    %749 = vmatpush2.msra.mxu0 %v599
    %750 = vmatprep.subr.mxu0 0.0
    %751 = vmatpush2.msra.mxu0 %v598
    %752 = vmatprep.mubr.f32.mxu0 %v617
    %753 = vmatmul.mubr.f32.gmra.mxu0 %v616
    %v754 = vpop.f32.mrf.mxu0
    %v755 = vadd.f32 %v685, %v754
    %v756 = vpop.f32.mrf.mxu0
    %757 = vdwg.mxu0
    %v758 = vld [vmem:[#allocation8] sm:$0xff]
    %v759 = vld [vmem:[#allocation8 + $0x8] sm:$0xff]
    %v760 = vld [vmem:[#allocation8 + $0x10] sm:$0xff]
    %v761 = vld [vmem:[#allocation8 + $0x18] sm:$0xff]
    %v762 = vld [vmem:[#allocation8 + $0x20] sm:$0xff]
    %v763 = vld [vmem:[#allocation8 + $0x28] sm:$0xff]
    %v764 = vld [vmem:[#allocation8 + $0x30] sm:$0xff]
    %v765 = vld [vmem:[#allocation8 + $0x38] sm:$0xff]
    %v766 = vld [vmem:[#allocation8 + $0x40] sm:$0xff]
    %v767 = vld [vmem:[#allocation8 + $0x48] sm:$0xff]
    %v768 = vld [vmem:[#allocation8 + $0x50] sm:$0xff]
    %v769 = vld [vmem:[#allocation8 + $0x58] sm:$0xff]
    %v770 = vld [vmem:[#allocation8 + $0x60] sm:$0xff]
    %v771 = vld [vmem:[#allocation8 + $0x68] sm:$0xff]
    %v772 = vld [vmem:[#allocation8 + $0x70] sm:$0xff]
    %v773 = vld [vmem:[#allocation8 + $0x78] sm:$0xff]
    %v774 = vld [vmem:[#allocation10] sm:$0xff]
    %775 = vmatprep.subr.mxu0 0.0
    %776 = vmatpush1.msra.mxu0 %v773
    %777 = vmatprep.subr.mxu0 0.0
    %778 = vmatpush1.msra.mxu0 %v772
    %779 = vmatprep.subr.mxu0 0.0
    %780 = vmatpush1.msra.mxu0 %v771
    %781 = vmatprep.subr.mxu0 0.0
    %782 = vmatpush1.msra.mxu0 %v770
    %783 = vmatprep.subr.mxu0 0.0
    %784 = vmatpush1.msra.mxu0 %v769
    %785 = vmatprep.subr.mxu0 0.0
    %786 = vmatpush1.msra.mxu0 %v768
    %787 = vmatprep.subr.mxu0 0.0
    %788 = vmatpush1.msra.mxu0 %v767
    %789 = vmatprep.subr.mxu0 0.0
    %790 = vmatpush1.msra.mxu0 %v766
    %791 = vmatprep.subr.mxu0 0.0
    %792 = vmatpush1.msra.mxu0 %v765
    %793 = vmatprep.subr.mxu0 0.0
    %794 = vmatpush1.msra.mxu0 %v764
    %795 = vmatprep.subr.mxu0 0.0
    %796 = vmatpush1.msra.mxu0 %v763
    %797 = vmatprep.subr.mxu0 0.0
    %798 = vmatpush1.msra.mxu0 %v762
    %799 = vmatprep.subr.mxu0 0.0
    %800 = vmatpush1.msra.mxu0 %v761
    %801 = vmatprep.subr.mxu0 0.0
    %802 = vmatpush1.msra.mxu0 %v760
    %803 = vmatprep.subr.mxu0 0.0
    %804 = vmatpush1.msra.mxu0 %v759
    %805 = vmatprep.subr.mxu0 0.0
    %806 = vmatpush1.msra.mxu0 %v758
    %807 = vmatprep.subr.mxu0 0.0
    %808 = vmatpush2.msra.mxu0 0.0
    %809 = vmatprep.subr.mxu0 0.0
    %810 = vmatpush2.msra.mxu0 0.0
    %811 = vmatprep.subr.mxu0 0.0
    %812 = vmatpush2.msra.mxu0 0.0
    %813 = vmatprep.subr.mxu0 0.0
    %814 = vmatpush2.msra.mxu0 0.0
    %815 = vmatprep.subr.mxu0 0.0
    %816 = vmatpush2.msra.mxu0 0.0
    %817 = vmatprep.subr.mxu0 0.0
    %818 = vmatpush2.msra.mxu0 0.0
    %819 = vmatprep.subr.mxu0 0.0
    %820 = vmatpush2.msra.mxu0 0.0
    %821 = vmatprep.subr.mxu0 0.0
    %822 = vmatpush2.msra.mxu0 0.0
    %823 = vmatprep.subr.mxu0 0.0
    %824 = vmatpush2.msra.mxu0 0.0
    %825 = vmatprep.subr.mxu0 0.0
    %826 = vmatpush2.msra.mxu0 0.0
    %827 = vmatprep.subr.mxu0 0.0
    %828 = vmatpush2.msra.mxu0 0.0
    %829 = vmatprep.subr.mxu0 0.0
    %830 = vmatpush2.msra.mxu0 0.0
    %831 = vmatprep.subr.mxu0 0.0
    %832 = vmatpush2.msra.mxu0 0.0
    %833 = vmatprep.subr.mxu0 0.0
    %834 = vmatpush2.msra.mxu0 0.0
    %835 = vmatprep.subr.mxu0 0.0
    %836 = vmatpush2.msra.mxu0 0.0
    %837 = vmatprep.subr.mxu0 0.0
    %838 = vmatpush2.msra.mxu0 0.0
    %839 = vmatprep.mubr.f32.mxu0 0.0
    %840 = vmatmul.mubr.f32.gmra.mxu0 %v755
    %v841 = vpop.f32.mrf.mxu0
    %v842 = vadd.f32 %v774, %v841
    %v843 = vpop.f32.mrf.mxu0
    %844 = vdwg.mxu0
    %845 = vst [vmem:[#allocation11] sm:$0xff] %v842
    // Predicated region
    $region42: #{tpu_custom_call.1} parent=1 // pred_check
      _
    $region43: #{tpu_custom_call.1} parent=1 // pred_check_branch
      %847 = sbr.rel (0) target = $region45
    $region44: #{tpu_custom_call.1} parent=1 // pred_region
      %s849 = ssub.s32 128, 128
      %850 = vsyncadd [#allocation4], %s849
      %s852 = sshll.u32 [#allocation11], 4
      %s853 = int_to_ptr.vmem [resolvable:$true] %s852
      %855 = dma.vmem_to_hbm [thread:$0]  %s853, 128, %s5, [#allocation4]
    $region45: #{tpu_custom_call.1} parent=1 // pred_fallthru
      _
    // Predicated region
    $region46: #{tpu_custom_call.1} parent=1 // pred_check
      _
    $region47: #{tpu_custom_call.1} parent=1 // pred_check_branch
      %857 = sbr.rel (0) target = $region49
    $region48: #{tpu_custom_call.1} parent=1 // pred_region
      %858 = dma.done [#allocation4], 128
    $region49: #{tpu_custom_call.1} parent=1 // pred_fallthru
      _
    %859 = vsyncpa [#allocation3], 1
    %860 = vsyncpa [#allocation6], 1
    %861 = vsyncpa [#allocation9], 1
    %862 = vsyncpa [#allocation4], 1

</llo_original>
